<compile_context>
chip_gen: v6e
topology: v6e:2x2x1
jax: 0.10.0
libtpu: 0.0.40
codegen_flags: <defaults>
</compile_context>

<pallas_src>
import jax
import jax.numpy as jnp
from jax import lax
from jax.experimental import pallas as pl
from jax.experimental.pallas import tpu as pltpu


def _round_up(x, m):
    return (x + m - 1) // m * m


def _pick_tb(n, tb_max, chunk):
    """Pick the batch tile first; the wrapper then pads n to a multiple of it."""
    n128 = _round_up(n, 128)
    if n128 <= chunk:
        return n128                                  # single small tile, no inner loop
    tb = min(tb_max, (n128 // chunk) * chunk)        # multiple of `chunk`
    # Prefer >=2 grid steps (v7x dual TensorCore) when tiles can stay >= chunk.
    if _round_up(n, tb) // tb < 2 and tb >= 2 * chunk:
        tb = (tb // (2 * chunk)) * chunk
    return tb


def _pack_weights(params, reduce_last):
    """Pack all weights/biases into one small f32 (rows, 128) resident block."""
    w1, b1, w2, b2, w3, b3 = params
    f = w1.shape[0]
    c = w3.shape[1]
    assert f + 1 <= 128, "packed layout assumes feature count fits in one lane tile"
    w3_blk = (w3 if reduce_last else w3.T).astype(jnp.float32)   # (32, C) or (C, 32)
    r1, r2, r3 = 0, 16, 48
    rb3 = r3 + _round_up(w3_blk.shape[0], 8)
    rows = _round_up(rb3 + c, 8)
    pack = jnp.zeros((rows, 128), jnp.float32)
    pack = pack.at[r1:r1 + 16, 0:f].set(w1.T.astype(jnp.float32))       # w1^T (16, F)
    pack = pack.at[r1:r1 + 16, f:f + 1].set(b1.T.astype(jnp.float32))   # b1   (16, 1)
    pack = pack.at[r2:r2 + 32, 0:16].set(w2.T.astype(jnp.float32))      # w2^T (32, 16)
    pack = pack.at[r2:r2 + 32, 16:17].set(b2.T.astype(jnp.float32))     # b2   (32, 1)
    pack = pack.at[r3:r3 + w3_blk.shape[0], 0:w3_blk.shape[1]].set(w3_blk)
    pack = pack.at[rb3:rb3 + c, 0:1].set(b3.T.astype(jnp.float32))      # b3   (C, 1)
    return pack, (r1, r2, r3, rb3)


def _make_kernel(f, c, sub, n_chunks, reduce_last, r1, r2, r3, rb3):
    w3_rows = 32 if reduce_last else c
    w3_cols = c if reduce_last else 32

    def kernel(x_ref, pack_ref, o_ref):
        # Static slices of the packed, VMEM-resident weight block (free).
        w1t = pack_ref[r1:r1 + 16, 0:f]            # (16, F)
        b1 = pack_ref[r1:r1 + 16, f:f + 1]         # (16, 1)
        w2t = pack_ref[r2:r2 + 32, 0:16]           # (32, 16)
        b2 = pack_ref[r2:r2 + 32, 16:17]           # (32, 1)
        w3 = pack_ref[r3:r3 + w3_rows, 0:w3_cols]  # (32, C) or (C, 32)
        b3 = pack_ref[rb3:rb3 + c, 0:1]            # (C, 1)

        def process(off):
            xc = x_ref[pl.ds(off, sub), :]                         # (sub, F)
            # Contract the feature axis of BOTH operands: lane-dense (16, sub)
            # result, no transpose of the streamed tile required.
            h1 = lax.dot_general(w1t, xc, (((1,), (1,)), ((), ())),
                                 preferred_element_type=jnp.float32) + b1
            h1 = jnp.maximum(h1, 0.0)
            # TODO(synk): nn.Dropout(p=0.1) is identity at inference (eval mode); not applied.
            h2 = jnp.dot(w2t, h1, preferred_element_type=jnp.float32) + b2
            h2 = jnp.maximum(h2, 0.0)
            if reduce_last:
                # num_classes == 1: VPU multiply + cross-sublane (XLU) reduce
                # instead of a nearly idle MXU pass.
                logits = jnp.sum(w3 * h2, axis=0, keepdims=True) + b3
            else:
                logits = jnp.dot(w3, h2, preferred_element_type=jnp.float32) + b3
            # Sigmoid via a single EUP tanh: exact, overflow-free.
            o_ref[:, pl.ds(off, sub)] = 0.5 * (jnp.tanh(0.5 * logits) + 1.0)

        if n_chunks == 1:
            process(0)
        else:
            def body(j, carry):
                process(pl.multiple_of(j * sub, sub))
                return carry
            lax.fori_loop(0, n_chunks, body, 0, unroll=True)

    return kernel


def wbcnet_forward(x, params, *, tb_max=2048, chunk=512):
    """Fused WBCNet forward. x: (n, inp_size) f32 -> (n, num_classes) f32."""
    w1, b1, w2, b2, w3, b3 = params
    n, f = x.shape
    c = w3.shape[1]
    reduce_last = (c == 1)

    tb = _pick_tb(n, tb_max, chunk)           # tile first ...
    n_pad = _round_up(n, tb)                  # ... then pad batch to a multiple of it
    grid = (n_pad // tb,)
    sub = min(chunk, tb)                      # in-kernel sub-chunk width (lanes)
    n_chunks = tb // sub

    xp = x.astype(jnp.float32)
    if n_pad != n:
        xp = jnp.pad(xp, ((0, n_pad - n), (0, 0)))   # pad only; no HBM-side transpose

    pack, (r1, r2, r3, rb3) = _pack_weights(params, reduce_last)

    cost = pl.CostEstimate(
        flops=2 * n_pad * (f * 16 + 16 * 32 + 32 * c),
        transcendentals=n_pad * c,                           # one tanh per output
        bytes_accessed=4 * (n_pad * (f + c) + pack.size),
    )

    out_t = pl.pallas_call(
        _make_kernel(f, c, sub, n_chunks, reduce_last, r1, r2, r3, rb3),
        out_shape=jax.ShapeDtypeStruct((c, n_pad), jnp.float32),
        grid=grid,
        in_specs=[
            pl.BlockSpec((tb, f), lambda i: (i, 0)),         # streamed x tile
            pl.BlockSpec(pack.shape, lambda i: (0, 0)),      # resident packed weights
        ],
        out_specs=pl.BlockSpec((c, tb), lambda i: (0, i)),   # lane-dense output
        compiler_params=pltpu.CompilerParams(dimension_semantics=("parallel",)),
        cost_estimate=cost,
    )(xp, pack)

    return out_t[:, :n].T                                    # (n, C)


def init_params(key, inp_size, num_classes):
    """Deterministic init mimicking torch.nn.Linear default: U(-1/sqrt(fan_in), +1/sqrt(fan_in))."""
    dims = [(inp_size, 16), (16, 32), (32, num_classes)]
    params = []
    for (fan_in, fan_out) in dims:
        key, kw, kb = jax.random.split(key, 3)
        bound = 1.0 / jnp.sqrt(float(fan_in))
        w = jax.random.uniform(kw, (fan_in, fan_out), jnp.float32, -bound, bound)
        b = jax.random.uniform(kb, (1, fan_out), jnp.float32, -bound, bound)
        params.extend([w, b])
    return tuple(params)


def wbcnet_reference(x, params):
    """Pure-JAX reference for correctness check."""
    w1, b1, w2, b2, w3, b3 = params
    h1 = jnp.maximum(x @ w1 + b1, 0.0)
    h2 = jnp.maximum(h1 @ w2 + b2, 0.0)
    return jax.nn.sigmoid(h2 @ w3 + b3)


if __name__ == "__main__":
    inp_size = 30      # Wisconsin Breast Cancer feature count
    num_classes = 1    # binary classification (sigmoid output)

    key = jax.random.PRNGKey(0)
    key, kx1, kx2 = jax.random.split(key, 3)
    params = init_params(key, inp_size, num_classes)

    # Small-batch test: single grid step, single in-kernel chunk.
    x1 = jax.random.normal(kx1, (8, inp_size), jnp.float32)
    out1 = jax.block_until_ready(wbcnet_forward(x1, params))
    ref1 = wbcnet_reference(x1, params)
    assert out1.shape == (8, num_classes), out1.shape
    assert jnp.allclose(out1, ref1, atol=1e-4, rtol=0.0), (out1, ref1)

    # Multi-step / multi-chunk test: grid=(2,), 2 in-kernel sub-chunks, padded tail.
    x2 = jax.random.normal(kx2, (600, inp_size), jnp.float32)
    out2 = jax.block_until_ready(wbcnet_forward(x2, params, tb_max=512, chunk=256))
    ref2 = wbcnet_reference(x2, params)
    assert out2.shape == (600, num_classes), out2.shape
    assert jnp.allclose(out2, ref2, atol=1e-4, rtol=0.0)

    print("KERNEL_OK")
</pallas_src>

<mosaic_0001>
module attributes {stable_mosaic.version = 11 : i64} {
  func.func @kernel(%arg0: i32, %arg1: memref<128x30xf32, #tpu.memory_space<vmem>>, %arg2: memref<88x128xf32, #tpu.memory_space<vmem>>, %arg3: memref<1x128xf32, #tpu.memory_space<vmem>>) attributes {dimension_semantics = [#tpu.dimension_semantics<parallel>], iteration_bounds = array<i64: 1>, scalar_prefetch = 0 : i64, scratch_operands = 0 : i64, tpu.core_type = #tpu.core_type<tc>, window_params = [{transform_indices = @transform_0, window_bounds = array<i64: 128, 30>}, {pipeline_mode = #tpu.pipeline_mode<synchronous>, transform_indices = @transform_1, window_bounds = array<i64: 88, 128>}, {transform_indices = @transform_2, window_bounds = array<i64: 1, 128>}]} {
    %c0 = arith.constant 0 : index
    %c0_0 = arith.constant 0 : index
    %0 = vector.load %arg2[%c0, %c0_0] : memref<88x128xf32, #tpu.memory_space<vmem>>, vector<16x30xf32>
    %c0_1 = arith.constant 0 : index
    %c30 = arith.constant 30 : index
    %1 = vector.load %arg2[%c0_1, %c30] : memref<88x128xf32, #tpu.memory_space<vmem>>, vector<16x1xf32>
    %c16 = arith.constant 16 : index
    %c0_2 = arith.constant 0 : index
    %2 = vector.load %arg2[%c16, %c0_2] : memref<88x128xf32, #tpu.memory_space<vmem>>, vector<32x16xf32>
    %c16_3 = arith.constant 16 : index
    %c16_4 = arith.constant 16 : index
    %3 = vector.load %arg2[%c16_3, %c16_4] : memref<88x128xf32, #tpu.memory_space<vmem>>, vector<32x1xf32>
    %c48 = arith.constant 48 : index
    %c0_5 = arith.constant 0 : index
    %4 = vector.load %arg2[%c48, %c0_5] : memref<88x128xf32, #tpu.memory_space<vmem>>, vector<32x1xf32>
    %c80 = arith.constant 80 : index
    %c0_6 = arith.constant 0 : index
    %5 = vector.load %arg2[%c80, %c0_6] : memref<88x128xf32, #tpu.memory_space<vmem>>, vector<1x1xf32>
    %c0_7 = arith.constant 0 : index
    %c0_8 = arith.constant 0 : index
    %6 = vector.load %arg1[%c0_7, %c0_8] : memref<128x30xf32, #tpu.memory_space<vmem>>, vector<128x30xf32>
    %cst = arith.constant dense<0.000000e+00> : vector<16x128xf32>
    %7 = tpu.matmul %0, %6, %cst {dimension_numbers = #tpu.dot_dimension_numbers<[1], [1], [0], [0], [0, 0, 1, 0], [], []>} : vector<16x30xf32>, vector<128x30xf32>, vector<16x128xf32> -> vector<16x128xf32>
    %8 = vector.broadcast %1 : vector<16x1xf32> to vector<16x128xf32>
    %9 = arith.addf %7, %8 : vector<16x128xf32>
    %cst_9 = arith.constant 0.000000e+00 : f32
    %10 = vector.broadcast %cst_9 : f32 to vector<16x128xf32>
    %11 = arith.maximumf %9, %10 : vector<16x128xf32>
    %cst_10 = arith.constant dense<0.000000e+00> : vector<32x128xf32>
    %12 = tpu.matmul %2, %11, %cst_10 {dimension_numbers = #tpu.dot_dimension_numbers<[1], [0], [0], [1], [0, 0, 1, 1], [], []>} : vector<32x16xf32>, vector<16x128xf32>, vector<32x128xf32> -> vector<32x128xf32>
    %13 = vector.broadcast %3 : vector<32x1xf32> to vector<32x128xf32>
    %14 = arith.addf %12, %13 : vector<32x128xf32>
    %cst_11 = arith.constant 0.000000e+00 : f32
    %15 = vector.broadcast %cst_11 : f32 to vector<32x128xf32>
    %16 = arith.maximumf %14, %15 : vector<32x128xf32>
    %17 = vector.broadcast %4 : vector<32x1xf32> to vector<32x128xf32>
    %18 = arith.mulf %17, %16 : vector<32x128xf32>
    %cst_12 = arith.constant dense<0.000000e+00> : vector<128xf32>
    %19 = vector.multi_reduction <add>, %18, %cst_12 [0] : vector<32x128xf32> to vector<128xf32>
    %20 = vector.shape_cast %19 : vector<128xf32> to vector<1x128xf32>
    %21 = vector.broadcast %5 : vector<1x1xf32> to vector<1x128xf32>
    %22 = arith.addf %20, %21 : vector<1x128xf32>
    %cst_13 = arith.constant 5.000000e-01 : f32
    %23 = vector.broadcast %cst_13 : f32 to vector<1x128xf32>
    %24 = arith.mulf %23, %22 : vector<1x128xf32>
    %25 = math.tanh %24 : vector<1x128xf32>
    %cst_14 = arith.constant 1.000000e+00 : f32
    %26 = vector.broadcast %cst_14 : f32 to vector<1x128xf32>
    %27 = arith.addf %25, %26 : vector<1x128xf32>
    %cst_15 = arith.constant 5.000000e-01 : f32
    %28 = vector.broadcast %cst_15 : f32 to vector<1x128xf32>
    %29 = arith.mulf %28, %27 : vector<1x128xf32>
    %c0_16 = arith.constant 0 : index
    %c0_17 = arith.constant 0 : index
    %30 = vector.load %arg3[%c0_16, %c0_17] : memref<1x128xf32, #tpu.memory_space<vmem>>, vector<1x128xf32>
    tpu.vector_store %arg3[%c0_16, %c0_17], %29 {strides = array<i32>} : memref<1x128xf32, #tpu.memory_space<vmem>>, vector<1x128xf32>,
    return
  }
  func.func @transform_0(%arg0: i32) -> (i32, i32) {
    %c0_i32 = arith.constant 0 : i32
    %c0_i32_0 = arith.constant 0 : i32
    return %arg0, %c0_i32 : i32, i32
  }
  func.func @transform_1(%arg0: i32) -> (i32, i32) {
    %c0_i32 = arith.constant 0 : i32
    %c0_i32_0 = arith.constant 0 : i32
    %c0_i32_1 = arith.constant 0 : i32
    return %c0_i32, %c0_i32_0 : i32, i32
  }
  func.func @transform_2(%arg0: i32) -> (i32, i32) {
    %c0_i32 = arith.constant 0 : i32
    %c0_i32_0 = arith.constant 0 : i32
    return %c0_i32, %arg0 : i32, i32
  }
}

</mosaic_0001>

<llo_original>
// kernel: tpu_custom_call.1
$region0: #{tpu_custom_call.1}
  #allocation0 [shape = 'u32[]', space=smem, size = 0x4, offset = 0x4, fixed_abs, tag = 'smem constant byte address 0x4 - core index']
  #allocation1 [shape = 'u32[144,128]{1,0:T(1,128)}', space=vmem, size = 0x12000, scoped, tag = 'internal scratch']
  %s0 = inlined_call_operand.vmem [shape: f32[128,30], index: 0, kind: input, shape index: {}]
  %s1 = inlined_call_operand.vmem [shape: f32[88,128], index: 1, kind: input, shape index: {}]
  %s2 = inlined_call_operand.hbm [shape: f32[1,128], index: 2, kind: output, shape index: {}]
  %s3 = sld [smem:[#allocation0]]
  $region18: #{tpu_custom_call.1} parent=0
    _
  %s5 = ssub.s32 1, %s3
  %s6 = scalar_select 0, %s5, %s3
  $region1: #{tpu_custom_call.1} parent=0
    #allocation2 [shape = 'u8[512]{0}', space=vmem, size = 0x400, scoped, tag = 'output window, operand 0, single buffered']
    #allocation3 [shape = 's32[1]{0}', space=sflag, size = 0x4, scoped, tag = 'scoped memory for tpu_custom_call.1']
    %7 = vsyncpa [#allocation3], 0
    // Predicated region
    $region2: #{tpu_custom_call.1} parent=1 // pred_check
      _
    $region3: #{tpu_custom_call.1} parent=1 // pred_check_branch
      %9 = sbr.rel (0) target = $region5
    $region4: #{tpu_custom_call.1} parent=1 // pred_region
      _
    $region5: #{tpu_custom_call.1} parent=1 // pred_fallthru
      _
    // Predicated region
    $region6: #{tpu_custom_call.1} parent=1 // pred_check
      _
    $region7: #{tpu_custom_call.1} parent=1 // pred_check_branch
      %11 = sbr.rel (0) target = $region9
    $region8: #{tpu_custom_call.1} parent=1 // pred_region
      _
    $region9: #{tpu_custom_call.1} parent=1 // pred_fallthru
      _
    %v12 = vld [vmem:[%s1] sm:$0xff]
    %v13 = vld [vmem:[%s1 + $0x8] sm:$0xff]
    %v14 = vld [vmem:[%s1 + $0x10] sm:$0xff]
    %v15 = vld [vmem:[%s1 + $0x18] sm:$0xff]
    %v16 = vld [vmem:[%s1 + $0x20] sm:$0xff]
    %v17 = vld [vmem:[%s1 + $0x28] sm:$0xff]
    %v18 = vld [vmem:[%s1 + $0x30] sm:$0xff]
    %v19 = vld [vmem:[%s1 + $0x38] sm:$0xff]
    %v20 = vld [vmem:[%s1 + $0x40] sm:$0xff]
    %v21 = vld [vmem:[%s1 + $0x48] sm:$0xff]
    %v22 = vld [vmem:[%s1 + $0x50] sm:$0x1]
    %v23 = vld [vmem:[%s0] sm:$0xff]
    %v24 = vld [vmem:[%s0 + $0x8] sm:$0xff]
    %v25 = vld [vmem:[%s0 + $0x10] sm:$0xff]
    %v26 = vld [vmem:[%s0 + $0x18] sm:$0xff]
    %v27 = vld [vmem:[%s0 + $0x20] sm:$0xff]
    %v28 = vld [vmem:[%s0 + $0x28] sm:$0xff]
    %v29 = vld [vmem:[%s0 + $0x30] sm:$0xff]
    %v30 = vld [vmem:[%s0 + $0x38] sm:$0xff]
    %v31 = vld [vmem:[%s0 + $0x40] sm:$0xff]
    %v32 = vld [vmem:[%s0 + $0x48] sm:$0xff]
    %v33 = vld [vmem:[%s0 + $0x50] sm:$0xff]
    %v34 = vld [vmem:[%s0 + $0x58] sm:$0xff]
    %v35 = vld [vmem:[%s0 + $0x60] sm:$0xff]
    %v36 = vld [vmem:[%s0 + $0x68] sm:$0xff]
    %v37 = vld [vmem:[%s0 + $0x70] sm:$0xff]
    %v38 = vld [vmem:[%s0 + $0x78] sm:$0xff]
    %40 = vset.pattern.permute.xlu0 30
    %41 = vperm.xlu0 %40, %v12
    %v42 = vpop.permute.xlu0 %41
    %45 = vset.pattern.permute.xlu0 30
    %46 = vperm.xlu0 %45, %v13
    %v47 = vpop.permute.xlu0 %46
    %vm49 = vcmask 244736
    %v50 = vsel %vm49, %v12, 0
    %v52 = vsel %vm49, %v13, 0
    %v55 = vsel %vm49, %v23, 0
    %v58 = vsel %vm49, %v24, 0
    %v61 = vsel %vm49, %v25, 0
    %v64 = vsel %vm49, %v26, 0
    %v67 = vsel %vm49, %v27, 0
    %v70 = vsel %vm49, %v28, 0
    %v73 = vsel %vm49, %v29, 0
    %v76 = vsel %vm49, %v30, 0
    %v79 = vsel %vm49, %v31, 0
    %v82 = vsel %vm49, %v32, 0
    %v85 = vsel %vm49, %v33, 0
    %v88 = vsel %vm49, %v34, 0
    %v91 = vsel %vm49, %v35, 0
    %v94 = vsel %vm49, %v36, 0
    %v97 = vsel %vm49, %v37, 0
    %v100 = vsel %vm49, %v38, 0
    %102 = vmatprep.subr.mxu0 0.0
    %103 = vmatpush1.xpose.msra.mxu0 %v100
    %104 = vmatprep.subr.mxu0 0.0
    %105 = vmatpush1.xpose.msra.mxu0 %v97
    %106 = vmatprep.subr.mxu0 0.0
    %107 = vmatpush1.xpose.msra.mxu0 %v94
    %108 = vmatprep.subr.mxu0 0.0
    %109 = vmatpush1.xpose.msra.mxu0 %v91
    %110 = vmatprep.subr.mxu0 0.0
    %111 = vmatpush1.xpose.msra.mxu0 %v88
    %112 = vmatprep.subr.mxu0 0.0
    %113 = vmatpush1.xpose.msra.mxu0 %v85
    %114 = vmatprep.subr.mxu0 0.0
    %115 = vmatpush1.xpose.msra.mxu0 %v82
    %116 = vmatprep.subr.mxu0 0.0
    %117 = vmatpush1.xpose.msra.mxu0 %v79
    %118 = vmatprep.subr.mxu0 0.0
    %119 = vmatpush1.xpose.msra.mxu0 %v76
    %120 = vmatprep.subr.mxu0 0.0
    %121 = vmatpush1.xpose.msra.mxu0 %v73
    %122 = vmatprep.subr.mxu0 0.0
    %123 = vmatpush1.xpose.msra.mxu0 %v70
    %124 = vmatprep.subr.mxu0 0.0
    %125 = vmatpush1.xpose.msra.mxu0 %v67
    %126 = vmatprep.subr.mxu0 0.0
    %127 = vmatpush1.xpose.msra.mxu0 %v64
    %128 = vmatprep.subr.mxu0 0.0
    %129 = vmatpush1.xpose.msra.mxu0 %v61
    %130 = vmatprep.subr.mxu0 0.0
    %131 = vmatpush1.xpose.msra.mxu0 %v58
    %132 = vmatprep.subr.mxu0 0.0
    %133 = vmatpush1.xpose.msra.mxu0 %v55
    %134 = vmatprep.subr.mxu0 0.0
    %135 = vmatpush2.xpose.msra.mxu0 0.0
    %136 = vmatprep.subr.mxu0 0.0
    %137 = vmatpush2.xpose.msra.mxu0 0.0
    %138 = vmatprep.subr.mxu0 0.0
    %139 = vmatpush2.xpose.msra.mxu0 0.0
    %140 = vmatprep.subr.mxu0 0.0
    %141 = vmatpush2.xpose.msra.mxu0 0.0
    %142 = vmatprep.subr.mxu0 0.0
    %143 = vmatpush2.xpose.msra.mxu0 0.0
    %144 = vmatprep.subr.mxu0 0.0
    %145 = vmatpush2.xpose.msra.mxu0 0.0
    %146 = vmatprep.subr.mxu0 0.0
    %147 = vmatpush2.xpose.msra.mxu0 0.0
    %148 = vmatprep.subr.mxu0 0.0
    %149 = vmatpush2.xpose.msra.mxu0 0.0
    %150 = vmatprep.subr.mxu0 0.0
    %151 = vmatpush2.xpose.msra.mxu0 0.0
    %152 = vmatprep.subr.mxu0 0.0
    %153 = vmatpush2.xpose.msra.mxu0 0.0
    %154 = vmatprep.subr.mxu0 0.0
    %155 = vmatpush2.xpose.msra.mxu0 0.0
    %156 = vmatprep.subr.mxu0 0.0
    %157 = vmatpush2.xpose.msra.mxu0 0.0
    %158 = vmatprep.subr.mxu0 0.0
    %159 = vmatpush2.xpose.msra.mxu0 0.0
    %160 = vmatprep.subr.mxu0 0.0
    %161 = vmatpush2.xpose.msra.mxu0 0.0
    %162 = vmatprep.subr.mxu0 0.0
    %163 = vmatpush2.xpose.msra.mxu0 0.0
    %164 = vmatprep.subr.mxu0 0.0
    %165 = vmatpush2.xpose.msra.mxu0 0.0
    %166 = vmatprep.mubr.f32.mxu0 0.0
    %167 = vmatmul.mubr.f32.gmra.mxu0 %v50
    %v168 = vpop.f32.mrf.mxu0
    %v169 = vadd.f32 %v42, %v168
    %v170 = vpop.f32.mrf.mxu0
    %171 = vmatprep.mubr.f32.mxu0 0.0
    %172 = vmatmul.mubr.f32.gmra.mxu0 %v52
    %v173 = vpop.f32.mrf.mxu0
    %v174 = vadd.f32 %v47, %v173
    %v175 = vpop.f32.mrf.mxu0
    %176 = vdwg.mxu0
    %v177 = vmax.f32 %v169, 0.0
    %v178 = vmax.f32 %v174, 0.0
    %180 = vset.pattern.permute.xlu0 16
    %181 = vperm.xlu0 %180, %v14
    %v182 = vpop.permute.xlu0 %181
    %185 = vset.pattern.permute.xlu0 16
    %186 = vperm.xlu0 %185, %v15
    %v187 = vpop.permute.xlu0 %186
    %190 = vset.pattern.permute.xlu0 16
    %191 = vperm.xlu0 %190, %v16
    %v192 = vpop.permute.xlu0 %191
    %195 = vset.pattern.permute.xlu0 16
    %196 = vperm.xlu0 %195, %v17
    %v197 = vpop.permute.xlu0 %196
    %vm199 = vcmask 130048
    %v200 = vsel %vm199, %v14, 0
    %v202 = vsel %vm199, %v15, 0
    %v204 = vsel %vm199, %v16, 0
    %v206 = vsel %vm199, %v17, 0
    %208 = vmatprep.subr.mxu0 0.0
    %209 = vmatpush1.msra.mxu0 0.0
    %210 = vmatprep.subr.mxu0 0.0
    %211 = vmatpush1.msra.mxu0 0.0
    %212 = vmatprep.subr.mxu0 0.0
    %213 = vmatpush1.msra.mxu0 0.0
    %214 = vmatprep.subr.mxu0 0.0
    %215 = vmatpush1.msra.mxu0 0.0
    %216 = vmatprep.subr.mxu0 0.0
    %217 = vmatpush1.msra.mxu0 0.0
    %218 = vmatprep.subr.mxu0 0.0
    %219 = vmatpush1.msra.mxu0 0.0
    %220 = vmatprep.subr.mxu0 0.0
    %221 = vmatpush1.msra.mxu0 0.0
    %222 = vmatprep.subr.mxu0 0.0
    %223 = vmatpush1.msra.mxu0 0.0
    %224 = vmatprep.subr.mxu0 0.0
    %225 = vmatpush1.msra.mxu0 0.0
    %226 = vmatprep.subr.mxu0 0.0
    %227 = vmatpush1.msra.mxu0 0.0
    %228 = vmatprep.subr.mxu0 0.0
    %229 = vmatpush1.msra.mxu0 0.0
    %230 = vmatprep.subr.mxu0 0.0
    %231 = vmatpush1.msra.mxu0 0.0
    %232 = vmatprep.subr.mxu0 0.0
    %233 = vmatpush1.msra.mxu0 0.0
    %234 = vmatprep.subr.mxu0 0.0
    %235 = vmatpush1.msra.mxu0 0.0
    %236 = vmatprep.subr.mxu0 0.0
    %237 = vmatpush1.msra.mxu0 %v178
    %238 = vmatprep.subr.mxu0 0.0
    %239 = vmatpush1.msra.mxu0 %v177
    %240 = vmatprep.subr.mxu0 0.0
    %241 = vmatpush2.msra.mxu0 0.0
    %242 = vmatprep.subr.mxu0 0.0
    %243 = vmatpush2.msra.mxu0 0.0
    %244 = vmatprep.subr.mxu0 0.0
    %245 = vmatpush2.msra.mxu0 0.0
    %246 = vmatprep.subr.mxu0 0.0
    %247 = vmatpush2.msra.mxu0 0.0
    %248 = vmatprep.subr.mxu0 0.0
    %249 = vmatpush2.msra.mxu0 0.0
    %250 = vmatprep.subr.mxu0 0.0
    %251 = vmatpush2.msra.mxu0 0.0
    %252 = vmatprep.subr.mxu0 0.0
    %253 = vmatpush2.msra.mxu0 0.0
    %254 = vmatprep.subr.mxu0 0.0
    %255 = vmatpush2.msra.mxu0 0.0
    %256 = vmatprep.subr.mxu0 0.0
    %257 = vmatpush2.msra.mxu0 0.0
    %258 = vmatprep.subr.mxu0 0.0
    %259 = vmatpush2.msra.mxu0 0.0
    %260 = vmatprep.subr.mxu0 0.0
    %261 = vmatpush2.msra.mxu0 0.0
    %262 = vmatprep.subr.mxu0 0.0
    %263 = vmatpush2.msra.mxu0 0.0
    %264 = vmatprep.subr.mxu0 0.0
    %265 = vmatpush2.msra.mxu0 0.0
    %266 = vmatprep.subr.mxu0 0.0
    %267 = vmatpush2.msra.mxu0 0.0
    %268 = vmatprep.subr.mxu0 0.0
    %269 = vmatpush2.msra.mxu0 0.0
    %270 = vmatprep.subr.mxu0 0.0
    %271 = vmatpush2.msra.mxu0 0.0
    %272 = vmatprep.mubr.f32.mxu0 0.0
    %273 = vmatmul.mubr.f32.gmra.mxu0 %v200
    %v274 = vpop.f32.mrf.mxu0
    %v275 = vadd.f32 %v182, %v274
    %v276 = vpop.f32.mrf.mxu0
    %277 = vmatprep.mubr.f32.mxu0 0.0
    %278 = vmatmul.mubr.f32.gmra.mxu0 %v202
    %v279 = vpop.f32.mrf.mxu0
    %v280 = vadd.f32 %v187, %v279
    %v281 = vpop.f32.mrf.mxu0
    %282 = vmatprep.mubr.f32.mxu0 0.0
    %283 = vmatmul.mubr.f32.gmra.mxu0 %v204
    %v284 = vpop.f32.mrf.mxu0
    %v285 = vadd.f32 %v192, %v284
    %v286 = vpop.f32.mrf.mxu0
    %287 = vmatprep.mubr.f32.mxu0 0.0
    %288 = vmatmul.mubr.f32.gmra.mxu0 %v206
    %v289 = vpop.f32.mrf.mxu0
    %v290 = vadd.f32 %v197, %v289
    %v291 = vpop.f32.mrf.mxu0
    %292 = vdwg.mxu0
    %v293 = vmax.f32 %v275, 0.0
    %v294 = vmax.f32 %v280, 0.0
    %v295 = vmax.f32 %v285, 0.0
    %v296 = vmax.f32 %v290, 0.0
    %298 = vset.pattern.permute.xlu0 0
    %299 = vperm.xlu0 %298, %v18
    %v300 = vpop.permute.xlu0 %299
    %303 = vset.pattern.permute.xlu0 0
    %304 = vperm.xlu0 %303, %v19
    %v305 = vpop.permute.xlu0 %304
    %308 = vset.pattern.permute.xlu0 0
    %309 = vperm.xlu0 %308, %v20
    %v310 = vpop.permute.xlu0 %309
    %313 = vset.pattern.permute.xlu0 0
    %314 = vperm.xlu0 %313, %v21
    %v315 = vpop.permute.xlu0 %314
    %v317 = vmul.f32 %v300, %v293
    %v318 = vmul.f32 %v305, %v294
    %v319 = vmul.f32 %v310, %v295
    %v320 = vmul.f32 %v315, %v296
    %v321 = vadd.f32 %v317, %v318
    %v322 = vadd.f32 %v321, %v319
    %v323 = vadd.f32 %v322, %v320
    %v324 = vrot.slane %v323, 4
    %v325 = vadd.f32 %v323, %v324
    %v326 = vrot.slane %v325, 2
    %v327 = vadd.f32 %v325, %v326
    %v328 = vrot.slane %v327, 1
    %v329 = vadd.f32 %v327, %v328
    %331 = vset.pattern.permute.xlu0 0
    %332 = vperm.xlu0 %331, %v22
    %v333 = vpop.permute.xlu0 %332
    %v335 = vadd.f32 %v329, %v333
    %v336 = vmul.f32 %v335, 0.5
    %v337 = vtanh.pop %v336
    %v338 = vadd.f32 %v337, 1.0
    %v339 = vmul.f32 %v338, 0.5
    %340 = vst [vmem:[#allocation2] sm:$0x1] %v339
    // Predicated region
    $region10: #{tpu_custom_call.1} parent=1 // pred_check
      _
    $region11: #{tpu_custom_call.1} parent=1 // pred_check_branch
      %342 = sbr.rel (0) target = $region13
    $region12: #{tpu_custom_call.1} parent=1 // pred_region
      %s344 = ssub.s32 16, 16
      %345 = vsyncadd [#allocation3], %s344
      %s347 = sshll.u32 [#allocation2], 4
      %s348 = int_to_ptr.vmem [resolvable:$true] %s347
      %350 = dma.vmem_to_hbm [thread:$0]  %s348, 16, %s2, [#allocation3]
    $region13: #{tpu_custom_call.1} parent=1 // pred_fallthru
      _
    // Predicated region
    $region14: #{tpu_custom_call.1} parent=1 // pred_check
      _
    $region15: #{tpu_custom_call.1} parent=1 // pred_check_branch
      %352 = sbr.rel (0) target = $region17
    $region16: #{tpu_custom_call.1} parent=1 // pred_region
      %353 = dma.done [#allocation3], 16
    $region17: #{tpu_custom_call.1} parent=1 // pred_fallthru
      _
    %354 = vsyncpa [#allocation3], 1

</llo_original>
